<compile_context>
chip_gen: v7x
topology: tpu7x:2x2x1
jax: 0.10.0
libtpu: 0.0.40
codegen_flags: <defaults>
</compile_context>

<pallas_src>
import math

import jax
import jax.numpy as jnp
from jax.experimental import pallas as pl
from jax.experimental.pallas import tpu as pltpu


def _round_up(n, m):
    return ((n + m - 1) // m) * m


def _mlp_kernel(x_ref, w1_ref, b1_ref, w2_ref, b2_ref, w3_ref, b3_ref, o_ref):
    # Fused 3-layer MLP on one batch tile. The input dtype cast happens here on
    # the VPU (free) instead of as a separate XLA pass over x in HBM. Matmul
    # operands stream through the MXU in the weights' storage dtype (bf16 by
    # default); accumulation and biases are f32. Intermediates never touch HBM.
    x = x_ref[...].astype(w1_ref.dtype)                                # [TB, D_in]
    h1 = jnp.dot(x, w1_ref[...], preferred_element_type=jnp.float32)
    h1 = jnp.maximum(h1 + b1_ref[...], 0.0).astype(w2_ref.dtype)       # [TB, H]
    h2 = jnp.dot(h1, w2_ref[...], preferred_element_type=jnp.float32)
    h2 = jnp.maximum(h2 + b2_ref[...], 0.0).astype(w3_ref.dtype)       # [TB, H]
    out = jnp.dot(h2, w3_ref[...], preferred_element_type=jnp.float32)
    o_ref[...] = (out + b3_ref[...]).astype(o_ref.dtype)               # [TB, D_out]


_SINGLE_BUFFER_WEIGHTS_OK = True  # flipped off once if pipeline_mode is unsupported


def bezier_curve_forward(x, params, *, compute_dtype=jnp.bfloat16, row_tile=512):
    """Pallas implementation of BezierCurve.forward (the predictor MLP)."""
    global _SINGLE_BUFFER_WEIGHTS_OK

    w1, b1, w2, b2, w3, b3 = (params[k] for k in ("w1", "b1", "w2", "b2", "w3", "b3"))
    B, in_dim = x.shape
    hidden = w1.shape[1]
    out_dim = w3.shape[1]
    out_dtype = x.dtype

    # Weights -> compute dtype (tiny, one-time); biases stay f32 (added to the f32
    # accumulator). x is passed through untouched: its cast is fused into the kernel.
    # TODO(synk): for production hidden/input dims, zero-pad them once to multiples
    # of 128 so all three matmuls hit native lane-dense MXU tiles; at the shapes
    # below full-array blocks are legal and the kernel is DMA/launch-bound anyway.
    w1c, w2c, w3c = (w.astype(compute_dtype) for w in (w1, w2, w3))
    b1c, b2c, b3c = (b.astype(jnp.float32) for b in (b1, b2, b3))

    # Row tile: sublane-aligned for the streamed dtype (8 rows f32, 16 bf16, 32 i8).
    # Small batches use one full-batch block (block dim == array dim is always
    # legal); larger batches split into >= 2 aligned tiles so both v7x TensorCores
    # get work; the boundary block is left partial (no wrapper jnp.pad copy of x).
    sublane = 8 * max(1, 4 // jnp.dtype(x.dtype).itemsize)
    row_tile = max(int(row_tile), sublane)
    if B <= sublane:
        tb = B
    elif B <= 2 * row_tile:
        tb = _round_up(pl.cdiv(B, 2), sublane)
    else:
        tb = _round_up(row_tile, sublane)
    grid = (pl.cdiv(B, tb),)

    # VMEM footprint: single-buffered resident weights + double-buffered streamed
    # x/out tiles + f32 intermediates; 2x headroom and a 16 MiB floor, well under
    # v7x's 64 MiB per TensorCore.
    weight_bytes = sum(int(a.size) * a.dtype.itemsize
                       for a in (w1c, b1c, w2c, b2c, w3c, b3c))
    stream_bytes = 2 * tb * (in_dim * x.dtype.itemsize
                             + out_dim * jnp.dtype(out_dtype).itemsize)
    interm_bytes = 3 * tb * max(hidden, out_dim) * 4
    vmem_limit = int(min(max(2 * (weight_bytes + stream_bytes + interm_bytes) + (4 << 20),
                             16 << 20), 100 << 20))

    cost = pl.CostEstimate(
        flops=2 * B * (in_dim * hidden + hidden * hidden + hidden * out_dim),
        transcendentals=0,
        bytes_accessed=int(B * in_dim * x.dtype.itemsize + weight_bytes
                           + B * out_dim * jnp.dtype(out_dtype).itemsize),
    )

    def call(single_buffer_weights):
        if single_buffer_weights:
            # Grid-invariant weights/biases: constant index_map (never re-DMA'd)
            # plus a single VMEM buffer instead of the default double buffer.
            resident = lambda a: pl.BlockSpec(a.shape, lambda i: (0, 0),
                                              pipeline_mode=pl.Buffered(1))
        else:
            resident = lambda a: pl.BlockSpec(a.shape, lambda i: (0, 0))
        return pl.pallas_call(
            _mlp_kernel,
            out_shape=jax.ShapeDtypeStruct((B, out_dim), out_dtype),
            grid=grid,
            in_specs=[
                pl.BlockSpec((tb, in_dim), lambda i: (i, 0)),   # x: streamed row tiles
                resident(w1c), resident(b1c),                   # weights/biases: resident
                resident(w2c), resident(b2c),
                resident(w3c), resident(b3c),
            ],
            # Narrow (tb, out_dim) store: writes only the real output bytes
            # (masked vst) instead of a 128-lane zero-pad + wrapper re-slice,
            # which would inflate output-side HBM traffic ~12x.
            out_specs=pl.BlockSpec((tb, out_dim), lambda i: (i, 0)),
            compiler_params=pltpu.CompilerParams(
                dimension_semantics=("parallel",),  # megacore sharding on v7x
                vmem_limit_bytes=vmem_limit,
            ),
            cost_estimate=cost,
        )(x, w1c, b1c, w2c, b2c, w3c, b3c)

    if _SINGLE_BUFFER_WEIGHTS_OK:
        try:
            return call(True)
        except Exception:
            # Fallback for builds where pipeline_mode=pl.Buffered(1) is not
            # accepted by the top-level TPU pipeliner; semantics are identical.
            _SINGLE_BUFFER_WEIGHTS_OK = False
    return call(False)


def init_bezier_params(key, input_dim, hidden_dim, num_ctrl_pts, se3_dim):
    """Deterministic synthetic parameters (shapes match the PyTorch module)."""
    output_dim = se3_dim * num_ctrl_pts
    k1, k2, k3, k4, k5, k6 = jax.random.split(key, 6)
    scale1 = 1.0 / math.sqrt(input_dim)
    scale2 = 1.0 / math.sqrt(hidden_dim)
    return {
        # stored as (in, out) == W.T of torch's nn.Linear weight
        "w1": jax.random.uniform(k1, (input_dim, hidden_dim), jnp.float32, -scale1, scale1),
        "b1": jax.random.uniform(k2, (1, hidden_dim), jnp.float32, -scale1, scale1),
        "w2": jax.random.uniform(k3, (hidden_dim, hidden_dim), jnp.float32, -scale2, scale2),
        "b2": jax.random.uniform(k4, (1, hidden_dim), jnp.float32, -scale2, scale2),
        "w3": jax.random.uniform(k5, (hidden_dim, output_dim), jnp.float32, -scale2, scale2),
        "b3": jax.random.uniform(k6, (1, output_dim), jnp.float32, -scale2, scale2),
    }


def bezier_coeff(num_ctrl_pts, action_load_horizon):
    """The registered `coeff` buffer (used only by compute_loss, not forward)."""
    t = jnp.linspace(0.0, 1.0, action_load_horizon)                       # [T]
    n = num_ctrl_pts - 1
    j = jnp.arange(num_ctrl_pts, dtype=jnp.float32)                       # [K]
    comb = jnp.array([math.comb(n, int(jv)) for jv in range(num_ctrl_pts)],
                     dtype=jnp.float32)                                   # [K]
    return comb[:, None] * (1.0 - t)[None, :] ** (n - j[:, None]) * t[None, :] ** j[:, None]


if __name__ == "__main__":
    # Small, forward-consistent shapes.
    B = 8                 # batch
    input_dim = 32
    hidden_dim = 32
    num_ctrl_pts = 5
    se3_dim = 2           # output_dim = 10
    action_load_horizon = 16

    key = jax.random.PRNGKey(0)
    kx, kp = jax.random.split(key)
    x = jax.random.normal(kx, (B, input_dim), dtype=jnp.float32)
    params = init_bezier_params(kp, input_dim, hidden_dim, num_ctrl_pts, se3_dim)
    _ = bezier_coeff(num_ctrl_pts, action_load_horizon)  # buffer (not used by forward)

    def reference(xr, p, compute_dtype):
        hp = jax.lax.Precision.HIGHEST
        f = lambda a: a.astype(compute_dtype).astype(jnp.float32)
        h1 = jnp.maximum(jnp.dot(f(xr), f(p["w1"]), precision=hp) + p["b1"], 0.0)
        h2 = jnp.maximum(jnp.dot(f(h1), f(p["w2"]), precision=hp) + p["b2"], 0.0)
        return jnp.dot(f(h2), f(p["w3"]), precision=hp) + p["b3"]

    # 1) default bf16-operand path (f32 accumulation) vs bf16-cast reference.
    out_bf16 = jax.block_until_ready(bezier_curve_forward(x, params))
    ref_bf16 = reference(x, params, jnp.bfloat16)
    assert out_bf16.shape == (B, se3_dim * num_ctrl_pts)
    assert out_bf16.dtype == x.dtype
    assert jnp.allclose(out_bf16, ref_bf16, atol=2e-2, rtol=2e-2)

    # 2) f32 compute path. Tolerance is conservative on purpose: TPU MXUs may
    #    evaluate f32 matmuls via bf16 passes depending on generation/defaults.
    out_f32 = jax.block_until_ready(
        bezier_curve_forward(x, params, compute_dtype=jnp.float32))
    ref_f32 = reference(x, params, jnp.float32)
    assert out_f32.shape == (B, se3_dim * num_ctrl_pts)
    assert jnp.allclose(out_f32, ref_f32, atol=2e-2, rtol=2e-2)

    # 3) multi-tile batch grid with a partial boundary block (40 rows, tile 16 -> 3 tiles).
    xb = jax.random.normal(jax.random.PRNGKey(1), (40, input_dim), dtype=jnp.float32)
    out_b = jax.block_until_ready(bezier_curve_forward(xb, params, row_tile=16))
    ref_b = reference(xb, params, jnp.bfloat16)
    assert out_b.shape == (40, se3_dim * num_ctrl_pts)
    assert jnp.allclose(out_b, ref_b, atol=2e-2, rtol=2e-2)

    print("KERNEL_OK")
</pallas_src>

<mosaic_0001>
module attributes {stable_mosaic.version = 11 : i64} {
  func.func @_mlp_kernel(%arg0: i32, %arg1: memref<8x32xf32, #tpu.memory_space<vmem>>, %arg2: memref<32x32xbf16, #tpu.memory_space<vmem>>, %arg3: memref<1x32xf32, #tpu.memory_space<vmem>>, %arg4: memref<32x32xbf16, #tpu.memory_space<vmem>>, %arg5: memref<1x32xf32, #tpu.memory_space<vmem>>, %arg6: memref<32x10xbf16, #tpu.memory_space<vmem>>, %arg7: memref<1x10xf32, #tpu.memory_space<vmem>>, %arg8: memref<8x10xf32, #tpu.memory_space<vmem>>) attributes {dimension_semantics = [#tpu.dimension_semantics<parallel>], iteration_bounds = array<i64: 1>, scalar_prefetch = 0 : i64, scratch_operands = 0 : i64, tpu.core_type = #tpu.core_type<tc>, window_params = [{transform_indices = @transform_0, window_bounds = array<i64: 8, 32>}, {pipeline_mode = #tpu.pipeline_mode<synchronous>, transform_indices = @transform_1, window_bounds = array<i64: 32, 32>}, {pipeline_mode = #tpu.pipeline_mode<synchronous>, transform_indices = @transform_2, window_bounds = array<i64: 1, 32>}, {pipeline_mode = #tpu.pipeline_mode<synchronous>, transform_indices = @transform_3, window_bounds = array<i64: 32, 32>}, {pipeline_mode = #tpu.pipeline_mode<synchronous>, transform_indices = @transform_4, window_bounds = array<i64: 1, 32>}, {pipeline_mode = #tpu.pipeline_mode<synchronous>, transform_indices = @transform_5, window_bounds = array<i64: 32, 10>}, {pipeline_mode = #tpu.pipeline_mode<synchronous>, transform_indices = @transform_6, window_bounds = array<i64: 1, 10>}, {transform_indices = @transform_7, window_bounds = array<i64: 8, 10>}]} {
    %c0 = arith.constant 0 : index
    %c0_0 = arith.constant 0 : index
    %0 = vector.load %arg1[%c0, %c0_0] : memref<8x32xf32, #tpu.memory_space<vmem>>, vector<8x32xf32>
    %1 = arith.truncf %0 : vector<8x32xf32> to vector<8x32xbf16>
    %c0_1 = arith.constant 0 : index
    %c0_2 = arith.constant 0 : index
    %2 = vector.load %arg2[%c0_1, %c0_2] : memref<32x32xbf16, #tpu.memory_space<vmem>>, vector<32x32xbf16>
    %cst = arith.constant dense<0.000000e+00> : vector<8x32xf32>
    %3 = tpu.matmul %1, %2, %cst {dimension_numbers = #tpu.dot_dimension_numbers<[1], [0], [0], [1], [0, 0, 1, 1], [], []>} : vector<8x32xbf16>, vector<32x32xbf16>, vector<8x32xf32> -> vector<8x32xf32>
    %c0_3 = arith.constant 0 : index
    %c0_4 = arith.constant 0 : index
    %4 = vector.load %arg3[%c0_3, %c0_4] : memref<1x32xf32, #tpu.memory_space<vmem>>, vector<1x32xf32>
    %5 = vector.broadcast %4 : vector<1x32xf32> to vector<8x32xf32>
    %6 = arith.addf %3, %5 : vector<8x32xf32>
    %cst_5 = arith.constant 0.000000e+00 : f32
    %7 = vector.broadcast %cst_5 : f32 to vector<8x32xf32>
    %8 = arith.maximumf %6, %7 : vector<8x32xf32>
    %9 = arith.truncf %8 : vector<8x32xf32> to vector<8x32xbf16>
    %c0_6 = arith.constant 0 : index
    %c0_7 = arith.constant 0 : index
    %10 = vector.load %arg4[%c0_6, %c0_7] : memref<32x32xbf16, #tpu.memory_space<vmem>>, vector<32x32xbf16>
    %cst_8 = arith.constant dense<0.000000e+00> : vector<8x32xf32>
    %11 = tpu.matmul %9, %10, %cst_8 {dimension_numbers = #tpu.dot_dimension_numbers<[1], [0], [0], [1], [0, 0, 1, 1], [], []>} : vector<8x32xbf16>, vector<32x32xbf16>, vector<8x32xf32> -> vector<8x32xf32>
    %c0_9 = arith.constant 0 : index
    %c0_10 = arith.constant 0 : index
    %12 = vector.load %arg5[%c0_9, %c0_10] : memref<1x32xf32, #tpu.memory_space<vmem>>, vector<1x32xf32>
    %13 = vector.broadcast %12 : vector<1x32xf32> to vector<8x32xf32>
    %14 = arith.addf %11, %13 : vector<8x32xf32>
    %cst_11 = arith.constant 0.000000e+00 : f32
    %15 = vector.broadcast %cst_11 : f32 to vector<8x32xf32>
    %16 = arith.maximumf %14, %15 : vector<8x32xf32>
    %17 = arith.truncf %16 : vector<8x32xf32> to vector<8x32xbf16>
    %c0_12 = arith.constant 0 : index
    %c0_13 = arith.constant 0 : index
    %18 = vector.load %arg6[%c0_12, %c0_13] : memref<32x10xbf16, #tpu.memory_space<vmem>>, vector<32x10xbf16>
    %cst_14 = arith.constant dense<0.000000e+00> : vector<8x10xf32>
    %19 = tpu.matmul %17, %18, %cst_14 {dimension_numbers = #tpu.dot_dimension_numbers<[1], [0], [0], [1], [0, 0, 1, 1], [], []>} : vector<8x32xbf16>, vector<32x10xbf16>, vector<8x10xf32> -> vector<8x10xf32>
    %c0_15 = arith.constant 0 : index
    %c0_16 = arith.constant 0 : index
    %20 = vector.load %arg7[%c0_15, %c0_16] : memref<1x10xf32, #tpu.memory_space<vmem>>, vector<1x10xf32>
    %21 = vector.broadcast %20 : vector<1x10xf32> to vector<8x10xf32>
    %22 = arith.addf %19, %21 : vector<8x10xf32>
    %c0_17 = arith.constant 0 : index
    %c0_18 = arith.constant 0 : index
    %23 = vector.load %arg8[%c0_17, %c0_18] : memref<8x10xf32, #tpu.memory_space<vmem>>, vector<8x10xf32>
    tpu.vector_store %arg8[%c0_17, %c0_18], %22 {strides = array<i32>} : memref<8x10xf32, #tpu.memory_space<vmem>>, vector<8x10xf32>,
    return
  }
  func.func @transform_0(%arg0: i32) -> (i32, i32) {
    %c0_i32 = arith.constant 0 : i32
    %c0_i32_0 = arith.constant 0 : i32
    return %arg0, %c0_i32 : i32, i32
  }
  func.func @transform_1(%arg0: i32) -> (i32, i32) {
    %c0_i32 = arith.constant 0 : i32
    %c0_i32_0 = arith.constant 0 : i32
    %c0_i32_1 = arith.constant 0 : i32
    return %c0_i32, %c0_i32_0 : i32, i32
  }
  func.func @transform_2(%arg0: i32) -> (i32, i32) {
    %c0_i32 = arith.constant 0 : i32
    %c0_i32_0 = arith.constant 0 : i32
    %c0_i32_1 = arith.constant 0 : i32
    return %c0_i32, %c0_i32_0 : i32, i32
  }
  func.func @transform_3(%arg0: i32) -> (i32, i32) {
    %c0_i32 = arith.constant 0 : i32
    %c0_i32_0 = arith.constant 0 : i32
    %c0_i32_1 = arith.constant 0 : i32
    return %c0_i32, %c0_i32_0 : i32, i32
  }
  func.func @transform_4(%arg0: i32) -> (i32, i32) {
    %c0_i32 = arith.constant 0 : i32
    %c0_i32_0 = arith.constant 0 : i32
    %c0_i32_1 = arith.constant 0 : i32
    return %c0_i32, %c0_i32_0 : i32, i32
  }
  func.func @transform_5(%arg0: i32) -> (i32, i32) {
    %c0_i32 = arith.constant 0 : i32
    %c0_i32_0 = arith.constant 0 : i32
    %c0_i32_1 = arith.constant 0 : i32
    return %c0_i32, %c0_i32_0 : i32, i32
  }
  func.func @transform_6(%arg0: i32) -> (i32, i32) {
    %c0_i32 = arith.constant 0 : i32
    %c0_i32_0 = arith.constant 0 : i32
    %c0_i32_1 = arith.constant 0 : i32
    return %c0_i32, %c0_i32_0 : i32, i32
  }
  func.func @transform_7(%arg0: i32) -> (i32, i32) {
    %c0_i32 = arith.constant 0 : i32
    %c0_i32_0 = arith.constant 0 : i32
    return %arg0, %c0_i32 : i32, i32
  }
}

module attributes {stable_mosaic.version = 11 : i64} {
  func.func @_mlp_kernel(%arg0: i32, %arg1: memref<8x32xf32, #tpu.memory_space<vmem>>, %arg2: memref<32x32xbf16, #tpu.memory_space<vmem>>, %arg3: memref<1x32xf32, #tpu.memory_space<vmem>>, %arg4: memref<32x32xbf16, #tpu.memory_space<vmem>>, %arg5: memref<1x32xf32, #tpu.memory_space<vmem>>, %arg6: memref<32x10xbf16, #tpu.memory_space<vmem>>, %arg7: memref<1x10xf32, #tpu.memory_space<vmem>>, %arg8: memref<8x10xf32, #tpu.memory_space<vmem>>) attributes {dimension_semantics = [#tpu.dimension_semantics<parallel>], iteration_bounds = array<i64: 1>, scalar_prefetch = 0 : i64, scratch_operands = 0 : i64, tpu.core_type = #tpu.core_type<tc>, window_params = [{transform_indices = @transform_0, window_bounds = array<i64: 8, 32>}, {pipeline_mode = #tpu.pipeline_mode<synchronous>, transform_indices = @transform_1, window_bounds = array<i64: 32, 32>}, {pipeline_mode = #tpu.pipeline_mode<synchronous>, transform_indices = @transform_2, window_bounds = array<i64: 1, 32>}, {pipeline_mode = #tpu.pipeline_mode<synchronous>, transform_indices = @transform_3, window_bounds = array<i64: 32, 32>}, {pipeline_mode = #tpu.pipeline_mode<synchronous>, transform_indices = @transform_4, window_bounds = array<i64: 1, 32>}, {pipeline_mode = #tpu.pipeline_mode<synchronous>, transform_indices = @transform_5, window_bounds = array<i64: 32, 10>}, {pipeline_mode = #tpu.pipeline_mode<synchronous>, transform_indices = @transform_6, window_bounds = array<i64: 1, 10>}, {transform_indices = @transform_7, window_bounds = array<i64: 8, 10>}]} {
    %c0 = arith.constant 0 : index
    %c0_0 = arith.constant 0 : index
    %0 = vector.load %arg1[%c0, %c0_0] : memref<8x32xf32, #tpu.memory_space<vmem>>, vector<8x32xf32>
    %1 = arith.truncf %0 : vector<8x32xf32> to vector<8x32xbf16>
    %c0_1 = arith.constant 0 : index
    %c0_2 = arith.constant 0 : index
    %2 = vector.load %arg2[%c0_1, %c0_2] : memref<32x32xbf16, #tpu.memory_space<vmem>>, vector<32x32xbf16>
    %cst = arith.constant dense<0.000000e+00> : vector<8x32xf32>
    %3 = tpu.matmul %1, %2, %cst {dimension_numbers = #tpu.dot_dimension_numbers<[1], [0], [0], [1], [0, 0, 1, 1], [], []>} : vector<8x32xbf16>, vector<32x32xbf16>, vector<8x32xf32> -> vector<8x32xf32>
    %c0_3 = arith.constant 0 : index
    %c0_4 = arith.constant 0 : index
    %4 = vector.load %arg3[%c0_3, %c0_4] : memref<1x32xf32, #tpu.memory_space<vmem>>, vector<1x32xf32>
    %5 = vector.broadcast %4 : vector<1x32xf32> to vector<8x32xf32>
    %6 = arith.addf %3, %5 : vector<8x32xf32>
    %cst_5 = arith.constant 0.000000e+00 : f32
    %7 = vector.broadcast %cst_5 : f32 to vector<8x32xf32>
    %8 = arith.maximumf %6, %7 : vector<8x32xf32>
    %9 = arith.truncf %8 : vector<8x32xf32> to vector<8x32xbf16>
    %c0_6 = arith.constant 0 : index
    %c0_7 = arith.constant 0 : index
    %10 = vector.load %arg4[%c0_6, %c0_7] : memref<32x32xbf16, #tpu.memory_space<vmem>>, vector<32x32xbf16>
    %cst_8 = arith.constant dense<0.000000e+00> : vector<8x32xf32>
    %11 = tpu.matmul %9, %10, %cst_8 {dimension_numbers = #tpu.dot_dimension_numbers<[1], [0], [0], [1], [0, 0, 1, 1], [], []>} : vector<8x32xbf16>, vector<32x32xbf16>, vector<8x32xf32> -> vector<8x32xf32>
    %c0_9 = arith.constant 0 : index
    %c0_10 = arith.constant 0 : index
    %12 = vector.load %arg5[%c0_9, %c0_10] : memref<1x32xf32, #tpu.memory_space<vmem>>, vector<1x32xf32>
    %13 = vector.broadcast %12 : vector<1x32xf32> to vector<8x32xf32>
    %14 = arith.addf %11, %13 : vector<8x32xf32>
    %cst_11 = arith.constant 0.000000e+00 : f32
    %15 = vector.broadcast %cst_11 : f32 to vector<8x32xf32>
    %16 = arith.maximumf %14, %15 : vector<8x32xf32>
    %17 = arith.truncf %16 : vector<8x32xf32> to vector<8x32xbf16>
    %c0_12 = arith.constant 0 : index
    %c0_13 = arith.constant 0 : index
    %18 = vector.load %arg6[%c0_12, %c0_13] : memref<32x10xbf16, #tpu.memory_space<vmem>>, vector<32x10xbf16>
    %cst_14 = arith.constant dense<0.000000e+00> : vector<8x10xf32>
    %19 = tpu.matmul %17, %18, %cst_14 {dimension_numbers = #tpu.dot_dimension_numbers<[1], [0], [0], [1], [0, 0, 1, 1], [], []>} : vector<8x32xbf16>, vector<32x10xbf16>, vector<8x10xf32> -> vector<8x10xf32>
    %c0_15 = arith.constant 0 : index
    %c0_16 = arith.constant 0 : index
    %20 = vector.load %arg7[%c0_15, %c0_16] : memref<1x10xf32, #tpu.memory_space<vmem>>, vector<1x10xf32>
    %21 = vector.broadcast %20 : vector<1x10xf32> to vector<8x10xf32>
    %22 = arith.addf %19, %21 : vector<8x10xf32>
    %c0_17 = arith.constant 0 : index
    %c0_18 = arith.constant 0 : index
    %23 = vector.load %arg8[%c0_17, %c0_18] : memref<8x10xf32, #tpu.memory_space<vmem>>, vector<8x10xf32>
    tpu.vector_store %arg8[%c0_17, %c0_18], %22 {strides = array<i32>} : memref<8x10xf32, #tpu.memory_space<vmem>>, vector<8x10xf32>,
    return
  }
  func.func @transform_0(%arg0: i32) -> (i32, i32) {
    %c0_i32 = arith.constant 0 : i32
    %c0_i32_0 = arith.constant 0 : i32
    return %arg0, %c0_i32 : i32, i32
  }
  func.func @transform_1(%arg0: i32) -> (i32, i32) {
    %c0_i32 = arith.constant 0 : i32
    %c0_i32_0 = arith.constant 0 : i32
    %c0_i32_1 = arith.constant 0 : i32
    return %c0_i32, %c0_i32_0 : i32, i32
  }
  func.func @transform_2(%arg0: i32) -> (i32, i32) {
    %c0_i32 = arith.constant 0 : i32
    %c0_i32_0 = arith.constant 0 : i32
    %c0_i32_1 = arith.constant 0 : i32
    return %c0_i32, %c0_i32_0 : i32, i32
  }
  func.func @transform_3(%arg0: i32) -> (i32, i32) {
    %c0_i32 = arith.constant 0 : i32
    %c0_i32_0 = arith.constant 0 : i32
    %c0_i32_1 = arith.constant 0 : i32
    return %c0_i32, %c0_i32_0 : i32, i32
  }
  func.func @transform_4(%arg0: i32) -> (i32, i32) {
    %c0_i32 = arith.constant 0 : i32
    %c0_i32_0 = arith.constant 0 : i32
    %c0_i32_1 = arith.constant 0 : i32
    return %c0_i32, %c0_i32_0 : i32, i32
  }
  func.func @transform_5(%arg0: i32) -> (i32, i32) {
    %c0_i32 = arith.constant 0 : i32
    %c0_i32_0 = arith.constant 0 : i32
    %c0_i32_1 = arith.constant 0 : i32
    return %c0_i32, %c0_i32_0 : i32, i32
  }
  func.func @transform_6(%arg0: i32) -> (i32, i32) {
    %c0_i32 = arith.constant 0 : i32
    %c0_i32_0 = arith.constant 0 : i32
    %c0_i32_1 = arith.constant 0 : i32
    return %c0_i32, %c0_i32_0 : i32, i32
  }
  func.func @transform_7(%arg0: i32) -> (i32, i32) {
    %c0_i32 = arith.constant 0 : i32
    %c0_i32_0 = arith.constant 0 : i32
    return %arg0, %c0_i32 : i32, i32
  }
}

</mosaic_0001>

<llo_original>
// kernel: tpu_custom_call.1
$region0: #{tpu_custom_call.1}
  #allocation0 [shape = 'u32[]', space=smem, size = 0x4, offset = 0x4, fixed_abs, tag = 'smem constant byte address 0x4 - core index']
  #allocation1 [shape = 'u32[144,128]{1,0:T(1,128)}', space=vmem, size = 0x12000, scoped, tag = 'internal scratch']
  %s0 = inlined_call_operand.hbm [shape: f32[8,32], index: 0, kind: input, shape index: {}]
  %s1 = inlined_call_operand.vmem [shape: bf16[32,32], index: 1, kind: input, shape index: {}]
  %s2 = inlined_call_operand.vmem [shape: f32[1,32], index: 2, kind: input, shape index: {}]
  %s3 = inlined_call_operand.vmem [shape: bf16[32,32], index: 3, kind: input, shape index: {}]
  %s4 = inlined_call_operand.vmem [shape: f32[1,32], index: 4, kind: input, shape index: {}]
  %s5 = inlined_call_operand.vmem [shape: bf16[32,10], index: 5, kind: input, shape index: {}]
  %s6 = inlined_call_operand.vmem [shape: f32[1,10], index: 6, kind: input, shape index: {}]
  %s7 = inlined_call_operand.hbm [shape: f32[8,10], index: 7, kind: output, shape index: {}]
  %s8 = sld [smem:[#allocation0]]
  $region42: #{tpu_custom_call.1} parent=0
    _
  %s10 = ssub.s32 1, %s8
  %s11 = scalar_select 0, %s10, %s8
  $region1: #{tpu_custom_call.1} parent=0
    #allocation2 [shape = 'u8[4096]{0}', space=vmem, size = 0x1000, scoped, tag = 'input window, operand 0, single buffered']
    #allocation3 [shape = 's32[1]{0}', space=sflag, size = 0x4, scoped, tag = 'scoped memory for tpu_custom_call.1']
    #allocation4 [shape = 's32[1]{0}', space=sflag, size = 0x4, scoped, tag = 'scoped memory for tpu_custom_call.1']
    #allocation5 [shape = 'u8[4096]{0}', space=vmem, size = 0x1000, scoped, tag = 'output window, operand 0, single buffered']
    %12 = vsyncpa [#allocation3], 0
    %13 = vsyncpa [#allocation4], 0
    // Predicated region
    $region2: #{tpu_custom_call.1} parent=1 // pred_check
      _
    $region3: #{tpu_custom_call.1} parent=1 // pred_check_branch
      %15 = sbr.rel (0) target = $region5
    $region4: #{tpu_custom_call.1} parent=1 // pred_region
      %s17 = ssub.s32 128, 128
      %18 = vsyncadd [#allocation3], %s17
      %s20 = sshll.u32 [#allocation2], 4
      %s21 = int_to_ptr.vmem [resolvable:$true] %s20
      %23 = dma.hbm_to_vmem [thread:$0]  %s0, 128, %s21, [#allocation3]
    $region5: #{tpu_custom_call.1} parent=1 // pred_fallthru
      _
    // Predicated region
    $region6: #{tpu_custom_call.1} parent=1 // pred_check
      _
    $region7: #{tpu_custom_call.1} parent=1 // pred_check_branch
      %25 = sbr.rel (0) target = $region9
    $region8: #{tpu_custom_call.1} parent=1 // pred_region
      _
    $region9: #{tpu_custom_call.1} parent=1 // pred_fallthru
      _
    // Predicated region
    $region10: #{tpu_custom_call.1} parent=1 // pred_check
      _
    $region11: #{tpu_custom_call.1} parent=1 // pred_check_branch
      %27 = sbr.rel (0) target = $region13
    $region12: #{tpu_custom_call.1} parent=1 // pred_region
      _
    $region13: #{tpu_custom_call.1} parent=1 // pred_fallthru
      _
    // Predicated region
    $region14: #{tpu_custom_call.1} parent=1 // pred_check
      _
    $region15: #{tpu_custom_call.1} parent=1 // pred_check_branch
      %29 = sbr.rel (0) target = $region17
    $region16: #{tpu_custom_call.1} parent=1 // pred_region
      _
    $region17: #{tpu_custom_call.1} parent=1 // pred_fallthru
      _
    // Predicated region
    $region18: #{tpu_custom_call.1} parent=1 // pred_check
      _
    $region19: #{tpu_custom_call.1} parent=1 // pred_check_branch
      %31 = sbr.rel (0) target = $region21
    $region20: #{tpu_custom_call.1} parent=1 // pred_region
      _
    $region21: #{tpu_custom_call.1} parent=1 // pred_fallthru
      _
    // Predicated region
    $region22: #{tpu_custom_call.1} parent=1 // pred_check
      _
    $region23: #{tpu_custom_call.1} parent=1 // pred_check_branch
      %33 = sbr.rel (0) target = $region25
    $region24: #{tpu_custom_call.1} parent=1 // pred_region
      _
    $region25: #{tpu_custom_call.1} parent=1 // pred_fallthru
      _
    // Predicated region
    $region26: #{tpu_custom_call.1} parent=1 // pred_check
      _
    $region27: #{tpu_custom_call.1} parent=1 // pred_check_branch
      %35 = sbr.rel (0) target = $region29
    $region28: #{tpu_custom_call.1} parent=1 // pred_region
      _
    $region29: #{tpu_custom_call.1} parent=1 // pred_fallthru
      _
    // Predicated region
    $region30: #{tpu_custom_call.1} parent=1 // pred_check
      _
    $region31: #{tpu_custom_call.1} parent=1 // pred_check_branch
      %37 = sbr.rel (0) target = $region33
    $region32: #{tpu_custom_call.1} parent=1 // pred_region
      %38 = dma.done [#allocation3], 128
    $region33: #{tpu_custom_call.1} parent=1 // pred_fallthru
      _
    %v40 = vld [vmem:[#allocation2] sm:$0xff]
    %v41 = vpack.c.bf16 %v40, %v40
    %v42 = vld [vmem:[%s1] sm:$0xf]
    %v43 = vld [vmem:[%s1 + $0x4] sm:$0xf]
    %v44 = vld [vmem:[%s1 + $0x8] sm:$0xf]
    %v45 = vld [vmem:[%s1 + $0xc] sm:$0xf]
    %v46 = vld [vmem:[%s2] sm:$0x1]
    %v48 = vlaneseq
    %v49 = vshrl.u32 %v48, 7
    %v50 = vsub.s32 0, %v49
    %v51 = vrot.slane %v46, %v50
    %v57 = vunpack.c.l.b16 %v42
    %v58 = vunpack.c.l.b16 %v43
    %v59 = vunpack.c.l.b16 %v44
    %v60 = vunpack.c.l.b16 %v45
    %v61 = vpack.c.b16 %v58, %v57
    %v62 = vpack.c.b16 %v60, %v59
    %vm65 = vcmask 261120
    %v67 = vsel %vm65, %v41, 0
    %69 = vmatprep.subr.bf16.mxu0 0
    %70 = vmatpush1.bf16.msra.mxu0 %v61
    %71 = vmatprep.subr.bf16.mxu0 0
    %72 = vmatpush1.bf16.msra.mxu0 %v62
    %73 = vmatprep.subr.bf16.mxu0 0
    %74 = vmatpush1.bf16.msra.mxu0 0
    %75 = vmatprep.subr.bf16.mxu0 0
    %76 = vmatpush1.bf16.msra.mxu0 0
    %77 = vmatprep.subr.bf16.mxu0 0
    %78 = vmatpush1.bf16.msra.mxu0 0
    %79 = vmatprep.subr.bf16.mxu0 0
    %80 = vmatpush1.bf16.msra.mxu0 0
    %81 = vmatprep.subr.bf16.mxu0 0
    %82 = vmatpush1.bf16.msra.mxu0 0
    %83 = vmatprep.subr.bf16.mxu0 0
    %84 = vmatpush1.bf16.msra.mxu0 0
    %85 = vmatprep.subr.bf16.mxu0 0
    %86 = vmatpush1.bf16.msra.mxu0 0
    %87 = vmatprep.subr.bf16.mxu0 0
    %88 = vmatpush1.bf16.msra.mxu0 0
    %89 = vmatprep.subr.bf16.mxu0 0
    %90 = vmatpush1.bf16.msra.mxu0 0
    %91 = vmatprep.subr.bf16.mxu0 0
    %92 = vmatpush1.bf16.msra.mxu0 0
    %93 = vmatprep.subr.bf16.mxu0 0
    %94 = vmatpush1.bf16.msra.mxu0 0
    %95 = vmatprep.subr.bf16.mxu0 0
    %96 = vmatpush1.bf16.msra.mxu0 0
    %97 = vmatprep.subr.bf16.mxu0 0
    %98 = vmatpush1.bf16.msra.mxu0 0
    %99 = vmatprep.subr.bf16.mxu0 0
    %100 = vmatpush1.bf16.msra.mxu0 0
    %101 = vmatprep.mubr.bf16.mxu0 0
    %102 = vmatmul.mubr.bf16.gmra.mrb[0].mxu0 %v67
    %v103 = vpop.f32.mrb[0].mxu0
    %v104 = vadd.f32 %v51, %v103
    %v105 = vpop.f32.mrb[0].mxu0
    %v106 = vpop.f32.mrb[0].mxu0
    %v107 = vpop.f32.mrb[0].mxu0
    %108 = vdwg.mxu0
    %v109 = vmax.f32 %v104, 0.0
    %v110 = vpack.c.bf16 %v109, %v109
    %v111 = vld [vmem:[%s3] sm:$0xf]
    %v112 = vld [vmem:[%s3 + $0x4] sm:$0xf]
    %v113 = vld [vmem:[%s3 + $0x8] sm:$0xf]
    %v114 = vld [vmem:[%s3 + $0xc] sm:$0xf]
    %v115 = vld [vmem:[%s4] sm:$0x1]
    %v117 = vlaneseq
    %v118 = vshrl.u32 %v117, 7
    %v119 = vsub.s32 0, %v118
    %v120 = vrot.slane %v115, %v119
    %v126 = vunpack.c.l.b16 %v111
    %v127 = vunpack.c.l.b16 %v112
    %v128 = vunpack.c.l.b16 %v113
    %v129 = vunpack.c.l.b16 %v114
    %v130 = vpack.c.b16 %v127, %v126
    %v131 = vpack.c.b16 %v129, %v128
    %v135 = vsel %vm65, %v110, 0
    %137 = vmatprep.subr.bf16.mxu0 0
    %138 = vmatpush1.bf16.msra.mxu0 %v130
    %139 = vmatprep.subr.bf16.mxu0 0
    %140 = vmatpush1.bf16.msra.mxu0 %v131
    %141 = vmatprep.subr.bf16.mxu0 0
    %142 = vmatpush1.bf16.msra.mxu0 0
    %143 = vmatprep.subr.bf16.mxu0 0
    %144 = vmatpush1.bf16.msra.mxu0 0
    %145 = vmatprep.subr.bf16.mxu0 0
    %146 = vmatpush1.bf16.msra.mxu0 0
    %147 = vmatprep.subr.bf16.mxu0 0
    %148 = vmatpush1.bf16.msra.mxu0 0
    %149 = vmatprep.subr.bf16.mxu0 0
    %150 = vmatpush1.bf16.msra.mxu0 0
    %151 = vmatprep.subr.bf16.mxu0 0
    %152 = vmatpush1.bf16.msra.mxu0 0
    %153 = vmatprep.subr.bf16.mxu0 0
    %154 = vmatpush1.bf16.msra.mxu0 0
    %155 = vmatprep.subr.bf16.mxu0 0
    %156 = vmatpush1.bf16.msra.mxu0 0
    %157 = vmatprep.subr.bf16.mxu0 0
    %158 = vmatpush1.bf16.msra.mxu0 0
    %159 = vmatprep.subr.bf16.mxu0 0
    %160 = vmatpush1.bf16.msra.mxu0 0
    %161 = vmatprep.subr.bf16.mxu0 0
    %162 = vmatpush1.bf16.msra.mxu0 0
    %163 = vmatprep.subr.bf16.mxu0 0
    %164 = vmatpush1.bf16.msra.mxu0 0
    %165 = vmatprep.subr.bf16.mxu0 0
    %166 = vmatpush1.bf16.msra.mxu0 0
    %167 = vmatprep.subr.bf16.mxu0 0
    %168 = vmatpush1.bf16.msra.mxu0 0
    %169 = vmatprep.mubr.bf16.mxu0 0
    %170 = vmatmul.mubr.bf16.gmra.mrb[0].mxu0 %v135
    %v171 = vpop.f32.mrb[0].mxu0
    %v172 = vadd.f32 %v120, %v171
    %v173 = vpop.f32.mrb[0].mxu0
    %v174 = vpop.f32.mrb[0].mxu0
    %v175 = vpop.f32.mrb[0].mxu0
    %176 = vdwg.mxu0
    %v177 = vmax.f32 %v172, 0.0
    %v178 = vpack.c.bf16 %v177, %v177
    %v179 = vld [vmem:[%s5] sm:$0xf]
    %v180 = vld [vmem:[%s5 + $0x4] sm:$0xf]
    %v181 = vld [vmem:[%s5 + $0x8] sm:$0xf]
    %v182 = vld [vmem:[%s5 + $0xc] sm:$0xf]
    %v183 = vld [vmem:[%s6] sm:$0x1]
    %v185 = vlaneseq
    %v186 = vshrl.u32 %v185, 7
    %v187 = vsub.s32 0, %v186
    %v188 = vrot.slane %v183, %v187
    %v194 = vunpack.c.l.b16 %v179
    %v195 = vunpack.c.l.b16 %v180
    %v196 = vunpack.c.l.b16 %v181
    %v197 = vunpack.c.l.b16 %v182
    %v198 = vpack.c.b16 %v195, %v194
    %v199 = vpack.c.b16 %v197, %v196
    %v203 = vsel %vm65, %v178, 0
    %205 = vmatprep.subr.bf16.mxu0 0
    %206 = vmatpush1.bf16.msra.mxu0 %v198
    %207 = vmatprep.subr.bf16.mxu0 0
    %208 = vmatpush1.bf16.msra.mxu0 %v199
    %209 = vmatprep.subr.bf16.mxu0 0
    %210 = vmatpush1.bf16.msra.mxu0 0
    %211 = vmatprep.subr.bf16.mxu0 0
    %212 = vmatpush1.bf16.msra.mxu0 0
    %213 = vmatprep.subr.bf16.mxu0 0
    %214 = vmatpush1.bf16.msra.mxu0 0
    %215 = vmatprep.subr.bf16.mxu0 0
    %216 = vmatpush1.bf16.msra.mxu0 0
    %217 = vmatprep.subr.bf16.mxu0 0
    %218 = vmatpush1.bf16.msra.mxu0 0
    %219 = vmatprep.subr.bf16.mxu0 0
    %220 = vmatpush1.bf16.msra.mxu0 0
    %221 = vmatprep.subr.bf16.mxu0 0
    %222 = vmatpush1.bf16.msra.mxu0 0
    %223 = vmatprep.subr.bf16.mxu0 0
    %224 = vmatpush1.bf16.msra.mxu0 0
    %225 = vmatprep.subr.bf16.mxu0 0
    %226 = vmatpush1.bf16.msra.mxu0 0
    %227 = vmatprep.subr.bf16.mxu0 0
    %228 = vmatpush1.bf16.msra.mxu0 0
    %229 = vmatprep.subr.bf16.mxu0 0
    %230 = vmatpush1.bf16.msra.mxu0 0
    %231 = vmatprep.subr.bf16.mxu0 0
    %232 = vmatpush1.bf16.msra.mxu0 0
    %233 = vmatprep.subr.bf16.mxu0 0
    %234 = vmatpush1.bf16.msra.mxu0 0
    %235 = vmatprep.subr.bf16.mxu0 0
    %236 = vmatpush1.bf16.msra.mxu0 0
    %237 = vmatprep.mubr.bf16.mxu0 0
    %238 = vmatmul.mubr.bf16.gmra.mrb[0].mxu0 %v203
    %v239 = vpop.f32.mrb[0].mxu0
    %v240 = vadd.f32 %v188, %v239
    %v241 = vpop.f32.mrb[0].mxu0
    %v242 = vpop.f32.mrb[0].mxu0
    %v243 = vpop.f32.mrb[0].mxu0
    %244 = vdwg.mxu0
    %vm245 = vcmask 80896
    %246 = vst.msk [vmem:[#allocation5] sm:$0xff] %vm245, %v240
    // Predicated region
    $region34: #{tpu_custom_call.1} parent=1 // pred_check
      _
    $region35: #{tpu_custom_call.1} parent=1 // pred_check_branch
      %248 = sbr.rel (0) target = $region37
    $region36: #{tpu_custom_call.1} parent=1 // pred_region
      %s250 = ssub.s32 128, 128
      %251 = vsyncadd [#allocation4], %s250
      %s253 = sshll.u32 [#allocation5], 4
      %s254 = int_to_ptr.vmem [resolvable:$true] %s253
      %256 = dma.vmem_to_hbm [thread:$0]  %s254, 128, %s7, [#allocation4]
    $region37: #{tpu_custom_call.1} parent=1 // pred_fallthru
      _
    // Predicated region
    $region38: #{tpu_custom_call.1} parent=1 // pred_check
      _
    $region39: #{tpu_custom_call.1} parent=1 // pred_check_branch
      %258 = sbr.rel (0) target = $region41
    $region40: #{tpu_custom_call.1} parent=1 // pred_region
      %259 = dma.done [#allocation4], 128
    $region41: #{tpu_custom_call.1} parent=1 // pred_fallthru
      _
    %260 = vsyncpa [#allocation3], 1
    %261 = vsyncpa [#allocation4], 1

// kernel: tpu_custom_call.1
$region0: #{tpu_custom_call.1}
  #allocation0 [shape = 'u32[]', space=smem, size = 0x4, offset = 0x4, fixed_abs, tag = 'smem constant byte address 0x4 - core index']
  #allocation1 [shape = 'u32[144,128]{1,0:T(1,128)}', space=vmem, size = 0x12000, scoped, tag = 'internal scratch']
  %s0 = inlined_call_operand.hbm [shape: f32[8,32], index: 0, kind: input, shape index: {}]
  %s1 = inlined_call_operand.vmem [shape: bf16[32,32], index: 1, kind: input, shape index: {}]
  %s2 = inlined_call_operand.vmem [shape: f32[1,32], index: 2, kind: input, shape index: {}]
  %s3 = inlined_call_operand.vmem [shape: bf16[32,32], index: 3, kind: input, shape index: {}]
  %s4 = inlined_call_operand.vmem [shape: f32[1,32], index: 4, kind: input, shape index: {}]
  %s5 = inlined_call_operand.vmem [shape: bf16[32,10], index: 5, kind: input, shape index: {}]
  %s6 = inlined_call_operand.vmem [shape: f32[1,10], index: 6, kind: input, shape index: {}]
  %s7 = inlined_call_operand.hbm [shape: f32[8,10], index: 7, kind: output, shape index: {}]
  %s8 = sld [smem:[#allocation0]]
  $region42: #{tpu_custom_call.1} parent=0
    _
  %s10 = ssub.s32 1, %s8
  %s11 = scalar_select 0, %s10, %s8
  $region1: #{tpu_custom_call.1} parent=0
    #allocation2 [shape = 'u8[4096]{0}', space=vmem, size = 0x1000, scoped, tag = 'input window, operand 0, single buffered']
    #allocation3 [shape = 's32[1]{0}', space=sflag, size = 0x4, scoped, tag = 'scoped memory for tpu_custom_call.1']
    #allocation4 [shape = 's32[1]{0}', space=sflag, size = 0x4, scoped, tag = 'scoped memory for tpu_custom_call.1']
    #allocation5 [shape = 'u8[4096]{0}', space=vmem, size = 0x1000, scoped, tag = 'output window, operand 0, single buffered']
    %12 = vsyncpa [#allocation3], 0
    %13 = vsyncpa [#allocation4], 0
    // Predicated region
    $region2: #{tpu_custom_call.1} parent=1 // pred_check
      _
    $region3: #{tpu_custom_call.1} parent=1 // pred_check_branch
      %15 = sbr.rel (0) target = $region5
    $region4: #{tpu_custom_call.1} parent=1 // pred_region
      %s17 = ssub.s32 128, 128
      %18 = vsyncadd [#allocation3], %s17
      %s20 = sshll.u32 [#allocation2], 4
      %s21 = int_to_ptr.vmem [resolvable:$true] %s20
      %23 = dma.hbm_to_vmem [thread:$0]  %s0, 128, %s21, [#allocation3]
    $region5: #{tpu_custom_call.1} parent=1 // pred_fallthru
      _
    // Predicated region
    $region6: #{tpu_custom_call.1} parent=1 // pred_check
      _
    $region7: #{tpu_custom_call.1} parent=1 // pred_check_branch
      %25 = sbr.rel (0) target = $region9
    $region8: #{tpu_custom_call.1} parent=1 // pred_region
      _
    $region9: #{tpu_custom_call.1} parent=1 // pred_fallthru
      _
    // Predicated region
    $region10: #{tpu_custom_call.1} parent=1 // pred_check
      _
    $region11: #{tpu_custom_call.1} parent=1 // pred_check_branch
      %27 = sbr.rel (0) target = $region13
    $region12: #{tpu_custom_call.1} parent=1 // pred_region
      _
    $region13: #{tpu_custom_call.1} parent=1 // pred_fallthru
      _
    // Predicated region
    $region14: #{tpu_custom_call.1} parent=1 // pred_check
      _
    $region15: #{tpu_custom_call.1} parent=1 // pred_check_branch
      %29 = sbr.rel (0) target = $region17
    $region16: #{tpu_custom_call.1} parent=1 // pred_region
      _
    $region17: #{tpu_custom_call.1} parent=1 // pred_fallthru
      _
    // Predicated region
    $region18: #{tpu_custom_call.1} parent=1 // pred_check
      _
    $region19: #{tpu_custom_call.1} parent=1 // pred_check_branch
      %31 = sbr.rel (0) target = $region21
    $region20: #{tpu_custom_call.1} parent=1 // pred_region
      _
    $region21: #{tpu_custom_call.1} parent=1 // pred_fallthru
      _
    // Predicated region
    $region22: #{tpu_custom_call.1} parent=1 // pred_check
      _
    $region23: #{tpu_custom_call.1} parent=1 // pred_check_branch
      %33 = sbr.rel (0) target = $region25
    $region24: #{tpu_custom_call.1} parent=1 // pred_region
      _
    $region25: #{tpu_custom_call.1} parent=1 // pred_fallthru
      _
    // Predicated region
    $region26: #{tpu_custom_call.1} parent=1 // pred_check
      _
    $region27: #{tpu_custom_call.1} parent=1 // pred_check_branch
      %35 = sbr.rel (0) target = $region29
    $region28: #{tpu_custom_call.1} parent=1 // pred_region
      _
    $region29: #{tpu_custom_call.1} parent=1 // pred_fallthru
      _
    // Predicated region
    $region30: #{tpu_custom_call.1} parent=1 // pred_check
      _
    $region31: #{tpu_custom_call.1} parent=1 // pred_check_branch
      %37 = sbr.rel (0) target = $region33
    $region32: #{tpu_custom_call.1} parent=1 // pred_region
      %38 = dma.done [#allocation3], 128
    $region33: #{tpu_custom_call.1} parent=1 // pred_fallthru
      _
    %v40 = vld [vmem:[#allocation2] sm:$0xff]
    %v41 = vpack.c.bf16 %v40, %v40
    %v42 = vld [vmem:[%s1] sm:$0xf]
    %v43 = vld [vmem:[%s1 + $0x4] sm:$0xf]
    %v44 = vld [vmem:[%s1 + $0x8] sm:$0xf]
    %v45 = vld [vmem:[%s1 + $0xc] sm:$0xf]
    %v46 = vld [vmem:[%s2] sm:$0x1]
    %v48 = vlaneseq
    %v49 = vshrl.u32 %v48, 7
    %v50 = vsub.s32 0, %v49
    %v51 = vrot.slane %v46, %v50
    %v57 = vunpack.c.l.b16 %v42
    %v58 = vunpack.c.l.b16 %v43
    %v59 = vunpack.c.l.b16 %v44
    %v60 = vunpack.c.l.b16 %v45
    %v61 = vpack.c.b16 %v58, %v57
    %v62 = vpack.c.b16 %v60, %v59
    %vm65 = vcmask 261120
    %v67 = vsel %vm65, %v41, 0
    %69 = vmatprep.subr.bf16.mxu0 0
    %70 = vmatpush1.bf16.msra.mxu0 %v61
    %71 = vmatprep.subr.bf16.mxu0 0
    %72 = vmatpush1.bf16.msra.mxu0 %v62
    %73 = vmatprep.subr.bf16.mxu0 0
    %74 = vmatpush1.bf16.msra.mxu0 0
    %75 = vmatprep.subr.bf16.mxu0 0
    %76 = vmatpush1.bf16.msra.mxu0 0
    %77 = vmatprep.subr.bf16.mxu0 0
    %78 = vmatpush1.bf16.msra.mxu0 0
    %79 = vmatprep.subr.bf16.mxu0 0
    %80 = vmatpush1.bf16.msra.mxu0 0
    %81 = vmatprep.subr.bf16.mxu0 0
    %82 = vmatpush1.bf16.msra.mxu0 0
    %83 = vmatprep.subr.bf16.mxu0 0
    %84 = vmatpush1.bf16.msra.mxu0 0
    %85 = vmatprep.subr.bf16.mxu0 0
    %86 = vmatpush1.bf16.msra.mxu0 0
    %87 = vmatprep.subr.bf16.mxu0 0
    %88 = vmatpush1.bf16.msra.mxu0 0
    %89 = vmatprep.subr.bf16.mxu0 0
    %90 = vmatpush1.bf16.msra.mxu0 0
    %91 = vmatprep.subr.bf16.mxu0 0
    %92 = vmatpush1.bf16.msra.mxu0 0
    %93 = vmatprep.subr.bf16.mxu0 0
    %94 = vmatpush1.bf16.msra.mxu0 0
    %95 = vmatprep.subr.bf16.mxu0 0
    %96 = vmatpush1.bf16.msra.mxu0 0
    %97 = vmatprep.subr.bf16.mxu0 0
    %98 = vmatpush1.bf16.msra.mxu0 0
    %99 = vmatprep.subr.bf16.mxu0 0
    %100 = vmatpush1.bf16.msra.mxu0 0
    %101 = vmatprep.mubr.bf16.mxu0 0
    %102 = vmatmul.mubr.bf16.gmra.mrb[0].mxu0 %v67
    %v103 = vpop.f32.mrb[0].mxu0
    %v104 = vadd.f32 %v51, %v103
    %v105 = vpop.f32.mrb[0].mxu0
    %v106 = vpop.f32.mrb[0].mxu0
    %v107 = vpop.f32.mrb[0].mxu0
    %108 = vdwg.mxu0
    %v109 = vmax.f32 %v104, 0.0
    %v110 = vpack.c.bf16 %v109, %v109
    %v111 = vld [vmem:[%s3] sm:$0xf]
    %v112 = vld [vmem:[%s3 + $0x4] sm:$0xf]
    %v113 = vld [vmem:[%s3 + $0x8] sm:$0xf]
    %v114 = vld [vmem:[%s3 + $0xc] sm:$0xf]
    %v115 = vld [vmem:[%s4] sm:$0x1]
    %v117 = vlaneseq
    %v118 = vshrl.u32 %v117, 7
    %v119 = vsub.s32 0, %v118
    %v120 = vrot.slane %v115, %v119
    %v126 = vunpack.c.l.b16 %v111
    %v127 = vunpack.c.l.b16 %v112
    %v128 = vunpack.c.l.b16 %v113
    %v129 = vunpack.c.l.b16 %v114
    %v130 = vpack.c.b16 %v127, %v126
    %v131 = vpack.c.b16 %v129, %v128
    %v135 = vsel %vm65, %v110, 0
    %137 = vmatprep.subr.bf16.mxu0 0
    %138 = vmatpush1.bf16.msra.mxu0 %v130
    %139 = vmatprep.subr.bf16.mxu0 0
    %140 = vmatpush1.bf16.msra.mxu0 %v131
    %141 = vmatprep.subr.bf16.mxu0 0
    %142 = vmatpush1.bf16.msra.mxu0 0
    %143 = vmatprep.subr.bf16.mxu0 0
    %144 = vmatpush1.bf16.msra.mxu0 0
    %145 = vmatprep.subr.bf16.mxu0 0
    %146 = vmatpush1.bf16.msra.mxu0 0
    %147 = vmatprep.subr.bf16.mxu0 0
    %148 = vmatpush1.bf16.msra.mxu0 0
    %149 = vmatprep.subr.bf16.mxu0 0
    %150 = vmatpush1.bf16.msra.mxu0 0
    %151 = vmatprep.subr.bf16.mxu0 0
    %152 = vmatpush1.bf16.msra.mxu0 0
    %153 = vmatprep.subr.bf16.mxu0 0
    %154 = vmatpush1.bf16.msra.mxu0 0
    %155 = vmatprep.subr.bf16.mxu0 0
    %156 = vmatpush1.bf16.msra.mxu0 0
    %157 = vmatprep.subr.bf16.mxu0 0
    %158 = vmatpush1.bf16.msra.mxu0 0
    %159 = vmatprep.subr.bf16.mxu0 0
    %160 = vmatpush1.bf16.msra.mxu0 0
    %161 = vmatprep.subr.bf16.mxu0 0
    %162 = vmatpush1.bf16.msra.mxu0 0
    %163 = vmatprep.subr.bf16.mxu0 0
    %164 = vmatpush1.bf16.msra.mxu0 0
    %165 = vmatprep.subr.bf16.mxu0 0
    %166 = vmatpush1.bf16.msra.mxu0 0
    %167 = vmatprep.subr.bf16.mxu0 0
    %168 = vmatpush1.bf16.msra.mxu0 0
    %169 = vmatprep.mubr.bf16.mxu0 0
    %170 = vmatmul.mubr.bf16.gmra.mrb[0].mxu0 %v135
    %v171 = vpop.f32.mrb[0].mxu0
    %v172 = vadd.f32 %v120, %v171
    %v173 = vpop.f32.mrb[0].mxu0
    %v174 = vpop.f32.mrb[0].mxu0
    %v175 = vpop.f32.mrb[0].mxu0
    %176 = vdwg.mxu0
    %v177 = vmax.f32 %v172, 0.0
    %v178 = vpack.c.bf16 %v177, %v177
    %v179 = vld [vmem:[%s5] sm:$0xf]
    %v180 = vld [vmem:[%s5 + $0x4] sm:$0xf]
    %v181 = vld [vmem:[%s5 + $0x8] sm:$0xf]
    %v182 = vld [vmem:[%s5 + $0xc] sm:$0xf]
    %v183 = vld [vmem:[%s6] sm:$0x1]
    %v185 = vlaneseq
    %v186 = vshrl.u32 %v185, 7
    %v187 = vsub.s32 0, %v186
    %v188 = vrot.slane %v183, %v187
    %v194 = vunpack.c.l.b16 %v179
    %v195 = vunpack.c.l.b16 %v180
    %v196 = vunpack.c.l.b16 %v181
    %v197 = vunpack.c.l.b16 %v182
    %v198 = vpack.c.b16 %v195, %v194
    %v199 = vpack.c.b16 %v197, %v196
    %v203 = vsel %vm65, %v178, 0
    %205 = vmatprep.subr.bf16.mxu0 0
    %206 = vmatpush1.bf16.msra.mxu0 %v198
    %207 = vmatprep.subr.bf16.mxu0 0
    %208 = vmatpush1.bf16.msra.mxu0 %v199
    %209 = vmatprep.subr.bf16.mxu0 0
    %210 = vmatpush1.bf16.msra.mxu0 0
    %211 = vmatprep.subr.bf16.mxu0 0
    %212 = vmatpush1.bf16.msra.mxu0 0
    %213 = vmatprep.subr.bf16.mxu0 0
    %214 = vmatpush1.bf16.msra.mxu0 0
    %215 = vmatprep.subr.bf16.mxu0 0
    %216 = vmatpush1.bf16.msra.mxu0 0
    %217 = vmatprep.subr.bf16.mxu0 0
    %218 = vmatpush1.bf16.msra.mxu0 0
    %219 = vmatprep.subr.bf16.mxu0 0
    %220 = vmatpush1.bf16.msra.mxu0 0
    %221 = vmatprep.subr.bf16.mxu0 0
    %222 = vmatpush1.bf16.msra.mxu0 0
    %223 = vmatprep.subr.bf16.mxu0 0
    %224 = vmatpush1.bf16.msra.mxu0 0
    %225 = vmatprep.subr.bf16.mxu0 0
    %226 = vmatpush1.bf16.msra.mxu0 0
    %227 = vmatprep.subr.bf16.mxu0 0
    %228 = vmatpush1.bf16.msra.mxu0 0
    %229 = vmatprep.subr.bf16.mxu0 0
    %230 = vmatpush1.bf16.msra.mxu0 0
    %231 = vmatprep.subr.bf16.mxu0 0
    %232 = vmatpush1.bf16.msra.mxu0 0
    %233 = vmatprep.subr.bf16.mxu0 0
    %234 = vmatpush1.bf16.msra.mxu0 0
    %235 = vmatprep.subr.bf16.mxu0 0
    %236 = vmatpush1.bf16.msra.mxu0 0
    %237 = vmatprep.mubr.bf16.mxu0 0
    %238 = vmatmul.mubr.bf16.gmra.mrb[0].mxu0 %v203
    %v239 = vpop.f32.mrb[0].mxu0
    %v240 = vadd.f32 %v188, %v239
    %v241 = vpop.f32.mrb[0].mxu0
    %v242 = vpop.f32.mrb[0].mxu0
    %v243 = vpop.f32.mrb[0].mxu0
    %244 = vdwg.mxu0
    %vm245 = vcmask 80896
    %246 = vst.msk [vmem:[#allocation5] sm:$0xff] %vm245, %v240
    // Predicated region
    $region34: #{tpu_custom_call.1} parent=1 // pred_check
      _
    $region35: #{tpu_custom_call.1} parent=1 // pred_check_branch
      %248 = sbr.rel (0) target = $region37
    $region36: #{tpu_custom_call.1} parent=1 // pred_region
      %s250 = ssub.s32 128, 128
      %251 = vsyncadd [#allocation4], %s250
      %s253 = sshll.u32 [#allocation5], 4
      %s254 = int_to_ptr.vmem [resolvable:$true] %s253
      %256 = dma.vmem_to_hbm [thread:$0]  %s254, 128, %s7, [#allocation4]
    $region37: #{tpu_custom_call.1} parent=1 // pred_fallthru
      _
    // Predicated region
    $region38: #{tpu_custom_call.1} parent=1 // pred_check
      _
    $region39: #{tpu_custom_call.1} parent=1 // pred_check_branch
      %258 = sbr.rel (0) target = $region41
    $region40: #{tpu_custom_call.1} parent=1 // pred_region
      %259 = dma.done [#allocation4], 128
    $region41: #{tpu_custom_call.1} parent=1 // pred_fallthru
      _
    %260 = vsyncpa [#allocation3], 1
    %261 = vsyncpa [#allocation4], 1

</llo_original>
